<compile_context>
chip_gen: v6e
topology: v6e:2x2x1
jax: 0.10.0
libtpu: 0.0.40
codegen_flags: <defaults>
</compile_context>

<pallas_src>
import functools

import jax
import jax.numpy as jnp
from jax.experimental import pallas as pl
from jax.experimental.pallas import tpu as pltpu


def _round_up(x, m):
    return (x + m - 1) // m * m


def _cdiv(a, b):
    return (a + b - 1) // b


def actor_kernel(obs_ref, w1_ref, b1_ref, w2_ref, b2_ref, w3_ref, b3_ref,
                 out_ref, *, action_bound):
    """One batch tile of the MLP forward.  Weights are bf16, math is f32."""
    bf16 = jnp.bfloat16

    # Layer 1: Linear + ReLU  (bf16 MXU inputs, f32 accumulate)
    x = obs_ref[...].astype(bf16)
    h1 = jnp.dot(x, w1_ref[...], preferred_element_type=jnp.float32)
    h1 = jnp.maximum(h1 + b1_ref[...], 0.0)

    # Layer 2: Linear + ReLU
    h2 = jnp.dot(h1.astype(bf16), w2_ref[...], preferred_element_type=jnp.float32)
    h2 = jnp.maximum(h2 + b2_ref[...], 0.0)

    # Layer 3: Linear + Tanh, scaled by (static) action_bound
    a = jnp.dot(h2.astype(bf16), w3_ref[...], preferred_element_type=jnp.float32)
    a = jnp.tanh(a + b3_ref[...])

    # Output tile is stored bf16 (lane-dense, halves the padded writeback).
    out_ref[...] = (action_bound * a).astype(out_ref.dtype)


def init_actor_params(key, obs_dim, hidden_dims, action_dim):
    """Deterministic synthetic init (uniform, like torch Linear default range).

    Weights are stored pre-transposed as [in_features, out_features] so each
    layer is y = x @ W + b (equivalent to torch's x @ W.T + b).
    """
    dims = [obs_dim] + list(hidden_dims) + [action_dim]
    params = []
    for i in range(len(dims) - 1):
        fan_in, fan_out = dims[i], dims[i + 1]
        key, kw, kb = jax.random.split(key, 3)
        bound = 1.0 / jnp.sqrt(jnp.float32(fan_in))
        w = jax.random.uniform(kw, (fan_in, fan_out), jnp.float32, -bound, bound)
        b = jax.random.uniform(kb, (fan_out,), jnp.float32, -bound, bound)
        params += [w, b]
    return tuple(params)


def prepare_actor_params(params):
    """Offline prep: zero-pad feature dims to multiples of 128, weights -> bf16.

    Padding is numerically inert: padded w1/b1 columns produce zeros through
    ReLU, padded w2/w3 rows contribute nothing, padded output columns are
    sliced away by the wrapper.
    """
    w1, b1, w2, b2, w3, b3 = params

    def pad_w(w, out_pad):
        fi, fo = w.shape
        wp = jnp.zeros((fi, out_pad), jnp.bfloat16)
        return wp.at[:, :fo].set(w.astype(jnp.bfloat16))

    def pad_wk(w, in_pad, out_pad):
        fi, fo = w.shape
        wp = jnp.zeros((in_pad, out_pad), jnp.bfloat16)
        return wp.at[:fi, :fo].set(w.astype(jnp.bfloat16))

    def pad_b(b, out_pad):
        bp = jnp.zeros((1, out_pad), jnp.float32)
        return bp.at[0, :b.shape[0]].set(b)

    h1p = _round_up(w1.shape[1], 128)   # 400 -> 512
    h2p = _round_up(w2.shape[1], 128)   # 300 -> 384
    adp = _round_up(w3.shape[1], 128)   # 6   -> 128

    return (pad_w(w1, h1p), pad_b(b1, h1p),
            pad_wk(w2, h1p, h2p), pad_b(b2, h2p),
            pad_wk(w3, h2p, adp), pad_b(b3, adp))


# Batch-tile cap: big enough to amortize per-step overhead, small enough that
# the live set (~7-8 MB at TB=1024) fits every generation's VMEM comfortably.
_TB_CAP = 1024


def actor_forward(obs, prepared_params, action_bound, action_dim):
    """Calls the Pallas kernel on a batch-gridded, lane-padded problem."""
    w1, b1, w2, b2, w3, b3 = prepared_params
    B, obs_dim = obs.shape
    adp = w3.shape[1]

    # --- batch tile selection -------------------------------------------
    # Pick TB so that TB * num_tiles barely exceeds the sublane-rounded batch
    # (at most num_tiles*8 - 1 wasted rows, instead of up to TB-1 before).
    B8 = _round_up(max(B, 1), 8)
    num_tiles = _cdiv(B8, _TB_CAP)
    if B >= 16:
        # Guarantee >= 2 grid steps so the "parallel" batch axis can be
        # sharded across v7x's two TensorCores (no effect on v5e/v6e).
        num_tiles = max(num_tiles, 2)
    TB = _round_up(_cdiv(B8, num_tiles), 8)
    Bp = TB * num_tiles
    if Bp != B:
        obs = jnp.pad(obs, ((0, Bp - B), (0, 0)))

    grid = (num_tiles,)

    def resident(arr):
        # Same block every grid step -> stays VMEM-resident (no re-DMA).
        return pl.BlockSpec(arr.shape, lambda i: (0, 0))

    flops = 2 * Bp * (obs_dim * w1.shape[1] + w2.shape[0] * w2.shape[1]
                      + w3.shape[0] * w3.shape[1])
    bytes_accessed = (obs.size * obs.dtype.itemsize        # obs read (f32)
                      + Bp * adp * 2                        # output write (bf16)
                      + sum(int(a.size) * a.dtype.itemsize
                            for a in (w1, b1, w2, b2, w3, b3)))
    cost = pl.CostEstimate(flops=flops,
                           transcendentals=Bp * adp,
                           bytes_accessed=bytes_accessed)

    out = pl.pallas_call(
        functools.partial(actor_kernel, action_bound=float(action_bound)),
        out_shape=jax.ShapeDtypeStruct((Bp, adp), jnp.bfloat16),
        grid=grid,
        in_specs=[pl.BlockSpec((TB, obs_dim), lambda i: (i, 0)),
                  resident(w1), resident(b1),
                  resident(w2), resident(b2),
                  resident(w3), resident(b3)],
        out_specs=pl.BlockSpec((TB, adp), lambda i: (i, 0)),
        compiler_params=pltpu.CompilerParams(
            dimension_semantics=("parallel",),
            vmem_limit_bytes=32 * 1024 * 1024),
        cost_estimate=cost,
    )(obs, w1, b1, w2, b2, w3, b3)

    # Slice away batch/feature padding; hand back f32 like the torch module.
    return out[:B, :action_dim].astype(jnp.float32)


def actor_reference_bf16(obs, params, action_bound):
    """Reference mirroring the kernel: bf16 dot inputs, f32 accum, bf16 out."""
    w1, b1, w2, b2, w3, b3 = params
    bf = jnp.bfloat16
    h1 = jnp.maximum(
        jnp.dot(obs.astype(bf), w1.astype(bf),
                preferred_element_type=jnp.float32) + b1, 0.0)
    h2 = jnp.maximum(
        jnp.dot(h1.astype(bf), w2.astype(bf),
                preferred_element_type=jnp.float32) + b2, 0.0)
    a = jnp.dot(h2.astype(bf), w3.astype(bf),
                preferred_element_type=jnp.float32) + b3
    out = action_bound * jnp.tanh(a)
    return out.astype(jnp.bfloat16).astype(jnp.float32)


def actor_reference_f32(obs, params, action_bound):
    """Full-precision semantic reference (matches the torch module)."""
    w1, b1, w2, b2, w3, b3 = params
    h1 = jnp.maximum(obs @ w1 + b1, 0.0)
    h2 = jnp.maximum(h1 @ w2 + b2, 0.0)
    return action_bound * jnp.tanh(h2 @ w3 + b3)


def _check(obs, params_f32, prepared, action_bound, action_dim):
    out = actor_forward(obs, prepared, action_bound, action_dim)
    out = jax.block_until_ready(out)
    assert out.shape == (obs.shape[0], action_dim)

    # Tight check against a reference that follows the same bf16 paths.
    ref_bf = actor_reference_bf16(obs, params_f32, action_bound)
    assert jnp.allclose(out, ref_bf, atol=5e-3, rtol=5e-3), \
        "mismatch vs bf16 reference"

    # Looser semantic check against the pure-f32 torch-equivalent math.
    ref_fp = actor_reference_f32(obs, params_f32, action_bound)
    assert jnp.allclose(out, ref_fp, atol=5e-2, rtol=5e-2), \
        "mismatch vs f32 reference"
    return out


if __name__ == "__main__":
    # Small, module-consistent shapes.
    obs_dim = 24
    hidden_dims = (400, 300)   # module defaults
    action_dim = 6
    action_bound = 2.0

    key = jax.random.PRNGKey(0)
    key, k_obs, k_obs2 = jax.random.split(key, 3)

    params_f32 = init_actor_params(key, obs_dim, hidden_dims, action_dim)
    prepared = prepare_actor_params(params_f32)

    # Small batch (single grid step).
    obs_small = jax.random.normal(k_obs, (4, obs_dim), jnp.float32)
    _check(obs_small, params_f32, prepared, action_bound, action_dim)

    # Medium, non-tile-aligned batch (exercises the >=2-step parallel grid).
    obs_med = jax.random.normal(k_obs2, (40, obs_dim), jnp.float32)
    _check(obs_med, params_f32, prepared, action_bound, action_dim)

    print("KERNEL_OK")
</pallas_src>

<mosaic_0001>
module attributes {stable_mosaic.version = 11 : i64} {
  func.func @actor_kernel(%arg0: i32, %arg1: memref<8x24xf32, #tpu.memory_space<vmem>>, %arg2: memref<24x512xbf16, #tpu.memory_space<vmem>>, %arg3: memref<1x512xf32, #tpu.memory_space<vmem>>, %arg4: memref<512x384xbf16, #tpu.memory_space<vmem>>, %arg5: memref<1x384xf32, #tpu.memory_space<vmem>>, %arg6: memref<384x128xbf16, #tpu.memory_space<vmem>>, %arg7: memref<1x128xf32, #tpu.memory_space<vmem>>, %arg8: memref<8x128xbf16, #tpu.memory_space<vmem>>) attributes {dimension_semantics = [#tpu.dimension_semantics<parallel>], iteration_bounds = array<i64: 1>, scalar_prefetch = 0 : i64, scratch_operands = 0 : i64, tpu.core_type = #tpu.core_type<tc>, window_params = [{transform_indices = @transform_0, window_bounds = array<i64: 8, 24>}, {pipeline_mode = #tpu.pipeline_mode<synchronous>, transform_indices = @transform_1, window_bounds = array<i64: 24, 512>}, {pipeline_mode = #tpu.pipeline_mode<synchronous>, transform_indices = @transform_2, window_bounds = array<i64: 1, 512>}, {pipeline_mode = #tpu.pipeline_mode<synchronous>, transform_indices = @transform_3, window_bounds = array<i64: 512, 384>}, {pipeline_mode = #tpu.pipeline_mode<synchronous>, transform_indices = @transform_4, window_bounds = array<i64: 1, 384>}, {pipeline_mode = #tpu.pipeline_mode<synchronous>, transform_indices = @transform_5, window_bounds = array<i64: 384, 128>}, {pipeline_mode = #tpu.pipeline_mode<synchronous>, transform_indices = @transform_6, window_bounds = array<i64: 1, 128>}, {transform_indices = @transform_7, window_bounds = array<i64: 8, 128>}]} {
    %c0 = arith.constant 0 : index
    %c0_0 = arith.constant 0 : index
    %0 = vector.load %arg1[%c0, %c0_0] : memref<8x24xf32, #tpu.memory_space<vmem>>, vector<8x24xf32>
    %1 = arith.truncf %0 : vector<8x24xf32> to vector<8x24xbf16>
    %c0_1 = arith.constant 0 : index
    %c0_2 = arith.constant 0 : index
    %2 = vector.load %arg2[%c0_1, %c0_2] : memref<24x512xbf16, #tpu.memory_space<vmem>>, vector<24x512xbf16>
    %cst = arith.constant dense<0.000000e+00> : vector<8x512xf32>
    %3 = tpu.matmul %1, %2, %cst {dimension_numbers = #tpu.dot_dimension_numbers<[1], [0], [0], [1], [0, 0, 1, 1], [], []>} : vector<8x24xbf16>, vector<24x512xbf16>, vector<8x512xf32> -> vector<8x512xf32>
    %c0_3 = arith.constant 0 : index
    %c0_4 = arith.constant 0 : index
    %4 = vector.load %arg3[%c0_3, %c0_4] : memref<1x512xf32, #tpu.memory_space<vmem>>, vector<1x512xf32>
    %5 = vector.broadcast %4 : vector<1x512xf32> to vector<8x512xf32>
    %6 = arith.addf %3, %5 : vector<8x512xf32>
    %cst_5 = arith.constant 0.000000e+00 : f32
    %7 = vector.broadcast %cst_5 : f32 to vector<8x512xf32>
    %8 = arith.maximumf %6, %7 : vector<8x512xf32>
    %9 = arith.truncf %8 : vector<8x512xf32> to vector<8x512xbf16>
    %c0_6 = arith.constant 0 : index
    %c0_7 = arith.constant 0 : index
    %10 = vector.load %arg4[%c0_6, %c0_7] : memref<512x384xbf16, #tpu.memory_space<vmem>>, vector<512x384xbf16>
    %cst_8 = arith.constant dense<0.000000e+00> : vector<8x384xf32>
    %11 = tpu.matmul %9, %10, %cst_8 {dimension_numbers = #tpu.dot_dimension_numbers<[1], [0], [0], [1], [0, 0, 1, 1], [], []>} : vector<8x512xbf16>, vector<512x384xbf16>, vector<8x384xf32> -> vector<8x384xf32>
    %c0_9 = arith.constant 0 : index
    %c0_10 = arith.constant 0 : index
    %12 = vector.load %arg5[%c0_9, %c0_10] : memref<1x384xf32, #tpu.memory_space<vmem>>, vector<1x384xf32>
    %13 = vector.broadcast %12 : vector<1x384xf32> to vector<8x384xf32>
    %14 = arith.addf %11, %13 : vector<8x384xf32>
    %cst_11 = arith.constant 0.000000e+00 : f32
    %15 = vector.broadcast %cst_11 : f32 to vector<8x384xf32>
    %16 = arith.maximumf %14, %15 : vector<8x384xf32>
    %17 = arith.truncf %16 : vector<8x384xf32> to vector<8x384xbf16>
    %c0_12 = arith.constant 0 : index
    %c0_13 = arith.constant 0 : index
    %18 = vector.load %arg6[%c0_12, %c0_13] : memref<384x128xbf16, #tpu.memory_space<vmem>>, vector<384x128xbf16>
    %cst_14 = arith.constant dense<0.000000e+00> : vector<8x128xf32>
    %19 = tpu.matmul %17, %18, %cst_14 {dimension_numbers = #tpu.dot_dimension_numbers<[1], [0], [0], [1], [0, 0, 1, 1], [], []>} : vector<8x384xbf16>, vector<384x128xbf16>, vector<8x128xf32> -> vector<8x128xf32>
    %c0_15 = arith.constant 0 : index
    %c0_16 = arith.constant 0 : index
    %20 = vector.load %arg7[%c0_15, %c0_16] : memref<1x128xf32, #tpu.memory_space<vmem>>, vector<1x128xf32>
    %21 = vector.broadcast %20 : vector<1x128xf32> to vector<8x128xf32>
    %22 = arith.addf %19, %21 : vector<8x128xf32>
    %23 = math.tanh %22 : vector<8x128xf32>
    %cst_17 = arith.constant 2.000000e+00 : f32
    %24 = vector.broadcast %cst_17 : f32 to vector<8x128xf32>
    %25 = arith.mulf %24, %23 : vector<8x128xf32>
    %26 = arith.truncf %25 : vector<8x128xf32> to vector<8x128xbf16>
    %c0_18 = arith.constant 0 : index
    %c0_19 = arith.constant 0 : index
    %27 = vector.load %arg8[%c0_18, %c0_19] : memref<8x128xbf16, #tpu.memory_space<vmem>>, vector<8x128xbf16>
    tpu.vector_store %arg8[%c0_18, %c0_19], %26 {strides = array<i32>} : memref<8x128xbf16, #tpu.memory_space<vmem>>, vector<8x128xbf16>,
    return
  }
  func.func @transform_0(%arg0: i32) -> (i32, i32) {
    %c0_i32 = arith.constant 0 : i32
    %c0_i32_0 = arith.constant 0 : i32
    return %arg0, %c0_i32 : i32, i32
  }
  func.func @transform_1(%arg0: i32) -> (i32, i32) {
    %c0_i32 = arith.constant 0 : i32
    %c0_i32_0 = arith.constant 0 : i32
    %c0_i32_1 = arith.constant 0 : i32
    return %c0_i32, %c0_i32_0 : i32, i32
  }
  func.func @transform_2(%arg0: i32) -> (i32, i32) {
    %c0_i32 = arith.constant 0 : i32
    %c0_i32_0 = arith.constant 0 : i32
    %c0_i32_1 = arith.constant 0 : i32
    return %c0_i32, %c0_i32_0 : i32, i32
  }
  func.func @transform_3(%arg0: i32) -> (i32, i32) {
    %c0_i32 = arith.constant 0 : i32
    %c0_i32_0 = arith.constant 0 : i32
    %c0_i32_1 = arith.constant 0 : i32
    return %c0_i32, %c0_i32_0 : i32, i32
  }
  func.func @transform_4(%arg0: i32) -> (i32, i32) {
    %c0_i32 = arith.constant 0 : i32
    %c0_i32_0 = arith.constant 0 : i32
    %c0_i32_1 = arith.constant 0 : i32
    return %c0_i32, %c0_i32_0 : i32, i32
  }
  func.func @transform_5(%arg0: i32) -> (i32, i32) {
    %c0_i32 = arith.constant 0 : i32
    %c0_i32_0 = arith.constant 0 : i32
    %c0_i32_1 = arith.constant 0 : i32
    return %c0_i32, %c0_i32_0 : i32, i32
  }
  func.func @transform_6(%arg0: i32) -> (i32, i32) {
    %c0_i32 = arith.constant 0 : i32
    %c0_i32_0 = arith.constant 0 : i32
    %c0_i32_1 = arith.constant 0 : i32
    return %c0_i32, %c0_i32_0 : i32, i32
  }
  func.func @transform_7(%arg0: i32) -> (i32, i32) {
    %c0_i32 = arith.constant 0 : i32
    %c0_i32_0 = arith.constant 0 : i32
    return %arg0, %c0_i32 : i32, i32
  }
}

</mosaic_0001>

<llo_original>
// kernel: tpu_custom_call.1
$region0: #{tpu_custom_call.1}
  #allocation0 [shape = 'u32[]', space=smem, size = 0x4, offset = 0x4, fixed_abs, tag = 'smem constant byte address 0x4 - core index']
  #allocation1 [shape = 'u32[144,128]{1,0:T(1,128)}', space=vmem, size = 0x12000, scoped, tag = 'internal scratch']
  %s0 = inlined_call_operand.hbm [shape: f32[8,24], index: 0, kind: input, shape index: {}]
  %s1 = inlined_call_operand.hbm [shape: bf16[24,512], index: 1, kind: input, shape index: {}]
  %s2 = inlined_call_operand.hbm [shape: f32[1,512], index: 2, kind: input, shape index: {}]
  %s3 = inlined_call_operand.hbm [shape: bf16[512,384], index: 3, kind: input, shape index: {}]
  %s4 = inlined_call_operand.vmem [shape: f32[1,384], index: 4, kind: input, shape index: {}]
  %s5 = inlined_call_operand.hbm [shape: bf16[384,128], index: 5, kind: input, shape index: {}]
  %s6 = inlined_call_operand.vmem [shape: f32[1,128], index: 6, kind: input, shape index: {}]
  %s7 = inlined_call_operand.hbm [shape: bf16[8,128], index: 7, kind: output, shape index: {}]
  %s8 = sld [smem:[#allocation0]]
  $region58: #{tpu_custom_call.1} parent=0
    _
  %s10 = ssub.s32 1, %s8
  %s11 = scalar_select 0, %s10, %s8
  $region1: #{tpu_custom_call.1} parent=0
    #allocation2 [shape = 'u8[4096]{0}', space=vmem, size = 0x1000, scoped, tag = 'input window, operand 0, single buffered']
    #allocation3 [shape = 's32[1]{0}', space=sflag, size = 0x4, scoped, tag = 'scoped memory for tpu_custom_call.1']
    #allocation4 [shape = 's32[1]{0}', space=sflag, size = 0x4, scoped, tag = 'scoped memory for tpu_custom_call.1']
    #allocation5 [shape = 'u8[24576]{0}', space=vmem, size = 0x6000, scoped, tag = 'input window, operand 1, single buffered']
    #allocation6 [shape = 's32[1]{0}', space=sflag, size = 0x4, scoped, tag = 'scoped memory for tpu_custom_call.1']
    #allocation7 [shape = 'u8[2048]{0}', space=vmem, size = 0x800, scoped, tag = 'input window, operand 2, single buffered']
    #allocation8 [shape = 'u8[393216]{0}', space=vmem, size = 0x60000, scoped, tag = 'input window, operand 3, single buffered']
    #allocation9 [shape = 's32[1]{0}', space=sflag, size = 0x4, scoped, tag = 'scoped memory for tpu_custom_call.1']
    #allocation10 [shape = 'u8[98304]{0}', space=vmem, size = 0x18000, scoped, tag = 'input window, operand 5, single buffered']
    #allocation11 [shape = 'u8[2048]{0}', space=vmem, size = 0x800, scoped, tag = 'output window, operand 0, single buffered']
    %12 = vsyncpa [#allocation3], 0
    %13 = vsyncpa [#allocation6], 0
    %14 = vsyncpa [#allocation9], 0
    %15 = vsyncpa [#allocation4], 0
    // Predicated region
    $region2: #{tpu_custom_call.1} parent=1 // pred_check
      _
    $region3: #{tpu_custom_call.1} parent=1 // pred_check_branch
      %17 = sbr.rel (0) target = $region5
    $region4: #{tpu_custom_call.1} parent=1 // pred_region
      %s19 = ssub.s32 128, 128
      %20 = vsyncadd [#allocation3], %s19
      %s22 = sshll.u32 [#allocation2], 4
      %s23 = int_to_ptr.vmem [resolvable:$true] %s22
      %25 = dma.hbm_to_vmem [thread:$0]  %s0, 128, %s23, [#allocation3]
    $region5: #{tpu_custom_call.1} parent=1 // pred_fallthru
      _
    // Predicated region
    $region6: #{tpu_custom_call.1} parent=1 // pred_check
      _
    $region7: #{tpu_custom_call.1} parent=1 // pred_check_branch
      %27 = sbr.rel (0) target = $region9
    $region8: #{tpu_custom_call.1} parent=1 // pred_region
      %s29 = ssub.s32 768, 768
      %30 = vsyncadd [#allocation6], %s29
      %s31 = sshll.u32 [#allocation5], 4
      %s32 = int_to_ptr.vmem [resolvable:$true] %s31
      %37 = dma.hbm_to_vmem [thread:$0]  %s1, 768, %s32, [#allocation6], 256, 256, 16
    $region9: #{tpu_custom_call.1} parent=1 // pred_fallthru
      _
    // Predicated region
    $region10: #{tpu_custom_call.1} parent=1 // pred_check
      _
    $region11: #{tpu_custom_call.1} parent=1 // pred_check_branch
      %39 = sbr.rel (0) target = $region13
    $region12: #{tpu_custom_call.1} parent=1 // pred_region
      %s41 = ssub.s32 64, 64
      %42 = vsyncadd [#allocation6], %s41
      %s44 = sshll.u32 [#allocation7], 4
      %s45 = int_to_ptr.vmem [resolvable:$true] %s44
      %47 = dma.hbm_to_vmem [thread:$0]  %s2, 64, %s45, [#allocation6]
    $region13: #{tpu_custom_call.1} parent=1 // pred_fallthru
      _
    // Predicated region
    $region14: #{tpu_custom_call.1} parent=1 // pred_check
      _
    $region15: #{tpu_custom_call.1} parent=1 // pred_check_branch
      %49 = sbr.rel (0) target = $region17
    $region16: #{tpu_custom_call.1} parent=1 // pred_region
      %s51 = ssub.s32 12288, 12288
      %52 = vsyncadd [#allocation9], %s51
      %s53 = sshll.u32 [#allocation8], 4
      %s54 = int_to_ptr.vmem [resolvable:$true] %s53
      %59 = dma.hbm_to_vmem [thread:$0]  %s3, 12288, %s54, [#allocation9], 192, 192, 12
    $region17: #{tpu_custom_call.1} parent=1 // pred_fallthru
      _
    // Predicated region
    $region18: #{tpu_custom_call.1} parent=1 // pred_check
      _
    $region19: #{tpu_custom_call.1} parent=1 // pred_check_branch
      %61 = sbr.rel (0) target = $region21
    $region20: #{tpu_custom_call.1} parent=1 // pred_region
      _
    $region21: #{tpu_custom_call.1} parent=1 // pred_fallthru
      _
    // Predicated region
    $region22: #{tpu_custom_call.1} parent=1 // pred_check
      _
    $region23: #{tpu_custom_call.1} parent=1 // pred_check_branch
      %63 = sbr.rel (0) target = $region25
    $region24: #{tpu_custom_call.1} parent=1 // pred_region
      %s65 = ssub.s32 3072, 3072
      %66 = vsyncadd [#allocation9], %s65
      %s67 = sshll.u32 [#allocation10], 4
      %s68 = int_to_ptr.vmem [resolvable:$true] %s67
      %73 = dma.hbm_to_vmem [thread:$0]  %s5, 3072, %s68, [#allocation9], 64, 64, 4
    $region25: #{tpu_custom_call.1} parent=1 // pred_fallthru
      _
    // Predicated region
    $region26: #{tpu_custom_call.1} parent=1 // pred_check
      _
    $region27: #{tpu_custom_call.1} parent=1 // pred_check_branch
      %75 = sbr.rel (0) target = $region29
    $region28: #{tpu_custom_call.1} parent=1 // pred_region
      _
    $region29: #{tpu_custom_call.1} parent=1 // pred_fallthru
      _
    // Predicated region
    $region30: #{tpu_custom_call.1} parent=1 // pred_check
      _
    $region31: #{tpu_custom_call.1} parent=1 // pred_check_branch
      %77 = sbr.rel (0) target = $region33
    $region32: #{tpu_custom_call.1} parent=1 // pred_region
      %78 = dma.done [#allocation3], 128
    $region33: #{tpu_custom_call.1} parent=1 // pred_fallthru
      _
    // Predicated region
    $region34: #{tpu_custom_call.1} parent=1 // pred_check
      _
    $region35: #{tpu_custom_call.1} parent=1 // pred_check_branch
      %80 = sbr.rel (0) target = $region37
    $region36: #{tpu_custom_call.1} parent=1 // pred_region
      %81 = dma.done [#allocation6], 768
    $region37: #{tpu_custom_call.1} parent=1 // pred_fallthru
      _
    // Predicated region
    $region38: #{tpu_custom_call.1} parent=1 // pred_check
      _
    $region39: #{tpu_custom_call.1} parent=1 // pred_check_branch
      %83 = sbr.rel (0) target = $region41
    $region40: #{tpu_custom_call.1} parent=1 // pred_region
      %84 = dma.done [#allocation6], 64
    $region41: #{tpu_custom_call.1} parent=1 // pred_fallthru
      _
    // Predicated region
    $region42: #{tpu_custom_call.1} parent=1 // pred_check
      _
    $region43: #{tpu_custom_call.1} parent=1 // pred_check_branch
      %86 = sbr.rel (0) target = $region45
    $region44: #{tpu_custom_call.1} parent=1 // pred_region
      %87 = dma.done [#allocation9], 12288
    $region45: #{tpu_custom_call.1} parent=1 // pred_fallthru
      _
    // Predicated region
    $region46: #{tpu_custom_call.1} parent=1 // pred_check
      _
    $region47: #{tpu_custom_call.1} parent=1 // pred_check_branch
      %89 = sbr.rel (0) target = $region49
    $region48: #{tpu_custom_call.1} parent=1 // pred_region
      %90 = dma.done [#allocation9], 3072
    $region49: #{tpu_custom_call.1} parent=1 // pred_fallthru
      _
    %v92 = vld [vmem:[#allocation2] sm:$0xff]
    %v93 = vpack.c.bf16 %v92, %v92
    %v94 = vld [vmem:[#allocation5] sm:$0xff]
    %v95 = vld [vmem:[#allocation5 + $0x8] sm:$0xff]
    %v96 = vld [vmem:[#allocation5 + $0x10] sm:$0xff]
    %v97 = vld [vmem:[#allocation5 + $0x18] sm:$0xff]
    %v98 = vld [vmem:[#allocation5 + $0x20] sm:$0xff]
    %v99 = vld [vmem:[#allocation5 + $0x28] sm:$0xff]
    %v100 = vld [vmem:[#allocation7] sm:$0xf]
    %v102 = vlaneseq
    %v103 = vshrl.u32 %v102, 7
    %v104 = vsub.s32 0, %v103
    %v105 = vrot.slane %v100, %v104
    %v106 = vlaneseq
    %v107 = vshrl.u32 %v106, 7
    %v108 = vsub.s32 1, %v107
    %v109 = vrot.slane %v100, %v108
    %v110 = vlaneseq
    %v111 = vshrl.u32 %v110, 7
    %v112 = vsub.s32 2, %v111
    %v113 = vrot.slane %v100, %v112
    %v114 = vlaneseq
    %v115 = vshrl.u32 %v114, 7
    %v116 = vsub.s32 3, %v115
    %v117 = vrot.slane %v100, %v116
    %v128 = vunpack.c.l.b16 %v94
    %v129 = vunpack.c.h.b16 %v94
    %v130 = vunpack.c.l.b16 %v95
    %v131 = vunpack.c.h.b16 %v95
    %v132 = vunpack.c.l.b16 %v96
    %v133 = vunpack.c.h.b16 %v96
    %v134 = vunpack.c.l.b16 %v97
    %v135 = vunpack.c.h.b16 %v97
    %v136 = vunpack.c.l.b16 %v98
    %v137 = vunpack.c.h.b16 %v98
    %v138 = vunpack.c.l.b16 %v99
    %v139 = vunpack.c.h.b16 %v99
    %v140 = vpack.c.b16 %v132, %v128
    %v141 = vpack.c.b16 %v133, %v129
    %v142 = vpack.c.b16 %v134, %v130
    %v143 = vpack.c.b16 %v135, %v131
    %v144 = vpack.c.b16 %v136, %v136
    %v145 = vpack.c.b16 %v137, %v137
    %v146 = vpack.c.b16 %v138, %v138
    %v147 = vpack.c.b16 %v139, %v139
    %vm152 = vcmask 195584
    %v154 = vsel %vm152, %v93, 0
    %vm156 = vcmask 1043456
    %v158 = vsel %vm156, %v144, 0
    %v161 = vsel %vm156, %v145, 0
    %v164 = vsel %vm156, %v146, 0
    %v167 = vsel %vm156, %v147, 0
    %169 = vmatprep.subr.bf16.mxu0 0
    %170 = vmatpush1.bf16.msra.mxu0 0
    %171 = vmatprep.subr.bf16.mxu0 0
    %172 = vmatpush1.bf16.msra.mxu0 0
    %173 = vmatprep.subr.bf16.mxu0 0
    %174 = vmatpush1.bf16.msra.mxu0 0
    %175 = vmatprep.subr.bf16.mxu0 0
    %176 = vmatpush1.bf16.msra.mxu0 0
    %177 = vmatprep.subr.bf16.mxu0 0
    %178 = vmatpush1.bf16.msra.mxu0 0
    %179 = vmatprep.subr.bf16.mxu0 0
    %180 = vmatpush1.bf16.msra.mxu0 0
    %181 = vmatprep.subr.bf16.mxu0 %v161
    %182 = vmatpush1.bf16.msra.mxu0 %v158
    %183 = vmatprep.subr.bf16.mxu0 %v141
    %184 = vmatpush1.bf16.msra.mxu0 %v140
    %185 = vmatprep.subr.bf16.mxu0 0
    %186 = vmatpush2.bf16.msra.mxu0 0
    %187 = vmatprep.subr.bf16.mxu0 0
    %188 = vmatpush2.bf16.msra.mxu0 0
    %189 = vmatprep.subr.bf16.mxu0 0
    %190 = vmatpush2.bf16.msra.mxu0 0
    %191 = vmatprep.subr.bf16.mxu0 0
    %192 = vmatpush2.bf16.msra.mxu0 0
    %193 = vmatprep.subr.bf16.mxu0 0
    %194 = vmatpush2.bf16.msra.mxu0 0
    %195 = vmatprep.subr.bf16.mxu0 0
    %196 = vmatpush2.bf16.msra.mxu0 0
    %197 = vmatprep.subr.bf16.mxu0 0
    %198 = vmatpush2.bf16.msra.mxu0 0
    %199 = vmatprep.subr.bf16.mxu0 0
    %200 = vmatpush2.bf16.msra.mxu0 0
    %201 = vmatprep.mubr.bf16.mxu0 0
    %202 = vmatmul.mubr.bf16.gmra.mxu0 %v154
    %v203 = vpop.f32.mrf.mxu0
    %v204 = vadd.f32 %v105, %v203
    %v205 = vpop.f32.mrf.mxu0
    %v206 = vadd.f32 %v109, %v205
    %v207 = vpop.f32.mrf.mxu0
    %v208 = vpop.f32.mrf.mxu0
    %209 = vdwg.mxu0
    %210 = vmatprep.subr.bf16.mxu0 0
    %211 = vmatpush1.bf16.msra.mxu0 0
    %212 = vmatprep.subr.bf16.mxu0 0
    %213 = vmatpush1.bf16.msra.mxu0 0
    %214 = vmatprep.subr.bf16.mxu0 0
    %215 = vmatpush1.bf16.msra.mxu0 0
    %216 = vmatprep.subr.bf16.mxu0 0
    %217 = vmatpush1.bf16.msra.mxu0 0
    %218 = vmatprep.subr.bf16.mxu0 0
    %219 = vmatpush1.bf16.msra.mxu0 0
    %220 = vmatprep.subr.bf16.mxu0 0
    %221 = vmatpush1.bf16.msra.mxu0 0
    %222 = vmatprep.subr.bf16.mxu0 %v167
    %223 = vmatpush1.bf16.msra.mxu0 %v164
    %224 = vmatprep.subr.bf16.mxu0 %v143
    %225 = vmatpush1.bf16.msra.mxu0 %v142
    %226 = vmatprep.subr.bf16.mxu0 0
    %227 = vmatpush2.bf16.msra.mxu0 0
    %228 = vmatprep.subr.bf16.mxu0 0
    %229 = vmatpush2.bf16.msra.mxu0 0
    %230 = vmatprep.subr.bf16.mxu0 0
    %231 = vmatpush2.bf16.msra.mxu0 0
    %232 = vmatprep.subr.bf16.mxu0 0
    %233 = vmatpush2.bf16.msra.mxu0 0
    %234 = vmatprep.subr.bf16.mxu0 0
    %235 = vmatpush2.bf16.msra.mxu0 0
    %236 = vmatprep.subr.bf16.mxu0 0
    %237 = vmatpush2.bf16.msra.mxu0 0
    %238 = vmatprep.subr.bf16.mxu0 0
    %239 = vmatpush2.bf16.msra.mxu0 0
    %240 = vmatprep.subr.bf16.mxu0 0
    %241 = vmatpush2.bf16.msra.mxu0 0
    %242 = vmatprep.mubr.bf16.mxu0 0
    %243 = vmatmul.mubr.bf16.gmra.mxu0 %v154
    %v244 = vpop.f32.mrf.mxu0
    %v245 = vadd.f32 %v113, %v244
    %v246 = vpop.f32.mrf.mxu0
    %v247 = vadd.f32 %v117, %v246
    %v248 = vpop.f32.mrf.mxu0
    %v249 = vpop.f32.mrf.mxu0
    %250 = vdwg.mxu0
    %v251 = vmax.f32 %v204, 0.0
    %v252 = vmax.f32 %v206, 0.0
    %v253 = vmax.f32 %v245, 0.0
    %v254 = vmax.f32 %v247, 0.0
    %v255 = vpack.c.bf16 %v251, %v251
    %v256 = vpack.c.bf16 %v252, %v252
    %v257 = vpack.c.bf16 %v253, %v253
    %v258 = vpack.c.bf16 %v254, %v254
    %v259 = vld [vmem:[#allocation8] sm:$0xff]
    %v260 = vld [vmem:[#allocation8 + $0x8] sm:$0xf]
    %v261 = vld [vmem:[#allocation8 + $0xc] sm:$0xff]
    %v262 = vld [vmem:[#allocation8 + $0x14] sm:$0xf]
    %v263 = vld [vmem:[#allocation8 + $0x18] sm:$0xff]
    %v264 = vld [vmem:[#allocation8 + $0x20] sm:$0xf]
    %v265 = vld [vmem:[#allocation8 + $0x24] sm:$0xff]
    %v266 = vld [vmem:[#allocation8 + $0x2c] sm:$0xf]
    %v267 = vld [vmem:[#allocation8 + $0x30] sm:$0xff]
    %v268 = vld [vmem:[#allocation8 + $0x38] sm:$0xf]
    %v269 = vld [vmem:[#allocation8 + $0x3c] sm:$0xff]
    %v270 = vld [vmem:[#allocation8 + $0x44] sm:$0xf]
    %v271 = vld [vmem:[#allocation8 + $0x48] sm:$0xff]
    %v272 = vld [vmem:[#allocation8 + $0x50] sm:$0xf]
    %v273 = vld [vmem:[#allocation8 + $0x54] sm:$0xff]
    %v274 = vld [vmem:[#allocation8 + $0x5c] sm:$0xf]
    %v275 = vld [vmem:[#allocation8 + $0x60] sm:$0xff]
    %v276 = vld [vmem:[#allocation8 + $0x68] sm:$0xf]
    %v277 = vld [vmem:[#allocation8 + $0x6c] sm:$0xff]
    %v278 = vld [vmem:[#allocation8 + $0x74] sm:$0xf]
    %v279 = vld [vmem:[#allocation8 + $0x78] sm:$0xff]
    %v280 = vld [vmem:[#allocation8 + $0x80] sm:$0xf]
    %v281 = vld [vmem:[#allocation8 + $0x84] sm:$0xff]
    %v282 = vld [vmem:[#allocation8 + $0x8c] sm:$0xf]
    %v283 = vld [vmem:[#allocation8 + $0x90] sm:$0xff]
    %v284 = vld [vmem:[#allocation8 + $0x98] sm:$0xf]
    %v285 = vld [vmem:[#allocation8 + $0x9c] sm:$0xff]
    %v286 = vld [vmem:[#allocation8 + $0xa4] sm:$0xf]
    %v287 = vld [vmem:[#allocation8 + $0xa8] sm:$0xff]
    %v288 = vld [vmem:[#allocation8 + $0xb0] sm:$0xf]
    %v289 = vld [vmem:[#allocation8 + $0xb4] sm:$0xff]
    %v290 = vld [vmem:[#allocation8 + $0xbc] sm:$0xf]
    %v291 = vld [vmem:[#allocation8 + $0xc0] sm:$0xff]
    %v292 = vld [vmem:[#allocation8 + $0xc8] sm:$0xf]
    %v293 = vld [vmem:[#allocation8 + $0xcc] sm:$0xff]
    %v294 = vld [vmem:[#allocation8 + $0xd4] sm:$0xf]
    %v295 = vld [vmem:[#allocation8 + $0xd8] sm:$0xff]
    %v296 = vld [vmem:[#allocation8 + $0xe0] sm:$0xf]
    %v297 = vld [vmem:[#allocation8 + $0xe4] sm:$0xff]
    %v298 = vld [vmem:[#allocation8 + $0xec] sm:$0xf]
    %v299 = vld [vmem:[#allocation8 + $0xf0] sm:$0xff]
    %v300 = vld [vmem:[#allocation8 + $0xf8] sm:$0xf]
    %v301 = vld [vmem:[#allocation8 + $0xfc] sm:$0xff]
    %v302 = vld [vmem:[#allocation8 + $0x104] sm:$0xf]
    %v303 = vld [vmem:[#allocation8 + $0x108] sm:$0xff]
    %v304 = vld [vmem:[#allocation8 + $0x110] sm:$0xf]
    %v305 = vld [vmem:[#allocation8 + $0x114] sm:$0xff]
    %v306 = vld [vmem:[#allocation8 + $0x11c] sm:$0xf]
    %v307 = vld [vmem:[#allocation8 + $0x120] sm:$0xff]
    %v308 = vld [vmem:[#allocation8 + $0x128] sm:$0xf]
    %v309 = vld [vmem:[#allocation8 + $0x12c] sm:$0xff]
    %v310 = vld [vmem:[#allocation8 + $0x134] sm:$0xf]
    %v311 = vld [vmem:[#allocation8 + $0x138] sm:$0xff]
    %v312 = vld [vmem:[#allocation8 + $0x140] sm:$0xf]
    %v313 = vld [vmem:[#allocation8 + $0x144] sm:$0xff]
    %v314 = vld [vmem:[#allocation8 + $0x14c] sm:$0xf]
    %v315 = vld [vmem:[#allocation8 + $0x150] sm:$0xff]
    %v316 = vld [vmem:[#allocation8 + $0x158] sm:$0xf]
    %v317 = vld [vmem:[#allocation8 + $0x15c] sm:$0xff]
    %v318 = vld [vmem:[#allocation8 + $0x164] sm:$0xf]
    %v319 = vld [vmem:[#allocation8 + $0x168] sm:$0xff]
    %v320 = vld [vmem:[#allocation8 + $0x170] sm:$0xf]
    %v321 = vld [vmem:[#allocation8 + $0x174] sm:$0xff]
    %v322 = vld [vmem:[#allocation8 + $0x17c] sm:$0xf]
    %v323 = vld [vmem:[#allocation8 + $0x180] sm:$0xff]
    %v324 = vld [vmem:[#allocation8 + $0x188] sm:$0xf]
    %v325 = vld [vmem:[#allocation8 + $0x18c] sm:$0xff]
    %v326 = vld [vmem:[#allocation8 + $0x194] sm:$0xf]
    %v327 = vld [vmem:[#allocation8 + $0x198] sm:$0xff]
    %v328 = vld [vmem:[#allocation8 + $0x1a0] sm:$0xf]
    %v329 = vld [vmem:[#allocation8 + $0x1a4] sm:$0xff]
    %v330 = vld [vmem:[#allocation8 + $0x1ac] sm:$0xf]
    %v331 = vld [vmem:[#allocation8 + $0x1b0] sm:$0xff]
    %v332 = vld [vmem:[#allocation8 + $0x1b8] sm:$0xf]
    %v333 = vld [vmem:[#allocation8 + $0x1bc] sm:$0xff]
    %v334 = vld [vmem:[#allocation8 + $0x1c4] sm:$0xf]
    %v335 = vld [vmem:[#allocation8 + $0x1c8] sm:$0xff]
    %v336 = vld [vmem:[#allocation8 + $0x1d0] sm:$0xf]
    %v337 = vld [vmem:[#allocation8 + $0x1d4] sm:$0xff]
    %v338 = vld [vmem:[#allocation8 + $0x1dc] sm:$0xf]
    %v339 = vld [vmem:[#allocation8 + $0x1e0] sm:$0xff]
    %v340 = vld [vmem:[#allocation8 + $0x1e8] sm:$0xf]
    %v341 = vld [vmem:[#allocation8 + $0x1ec] sm:$0xff]
    %v342 = vld [vmem:[#allocation8 + $0x1f4] sm:$0xf]
    %v343 = vld [vmem:[#allocation8 + $0x1f8] sm:$0xff]
    %v344 = vld [vmem:[#allocation8 + $0x200] sm:$0xf]
    %v345 = vld [vmem:[#allocation8 + $0x204] sm:$0xff]
    %v346 = vld [vmem:[#allocation8 + $0x20c] sm:$0xf]
    %v347 = vld [vmem:[#allocation8 + $0x210] sm:$0xff]
    %v348 = vld [vmem:[#allocation8 + $0x218] sm:$0xf]
    %v349 = vld [vmem:[#allocation8 + $0x21c] sm:$0xff]
    %v350 = vld [vmem:[#allocation8 + $0x224] sm:$0xf]
    %v351 = vld [vmem:[#allocation8 + $0x228] sm:$0xff]
    %v352 = vld [vmem:[#allocation8 + $0x230] sm:$0xf]
    %v353 = vld [vmem:[#allocation8 + $0x234] sm:$0xff]
    %v354 = vld [vmem:[#allocation8 + $0x23c] sm:$0xf]
    %v355 = vld [vmem:[#allocation8 + $0x240] sm:$0xff]
    %v356 = vld [vmem:[#allocation8 + $0x248] sm:$0xf]
    %v357 = vld [vmem:[#allocation8 + $0x24c] sm:$0xff]
    %v358 = vld [vmem:[#allocation8 + $0x254] sm:$0xf]
    %v359 = vld [vmem:[#allocation8 + $0x258] sm:$0xff]
    %v360 = vld [vmem:[#allocation8 + $0x260] sm:$0xf]
    %v361 = vld [vmem:[#allocation8 + $0x264] sm:$0xff]
    %v362 = vld [vmem:[#allocation8 + $0x26c] sm:$0xf]
    %v363 = vld [vmem:[#allocation8 + $0x270] sm:$0xff]
    %v364 = vld [vmem:[#allocation8 + $0x278] sm:$0xf]
    %v365 = vld [vmem:[#allocation8 + $0x27c] sm:$0xff]
    %v366 = vld [vmem:[#allocation8 + $0x284] sm:$0xf]
    %v367 = vld [vmem:[#allocation8 + $0x288] sm:$0xff]
    %v368 = vld [vmem:[#allocation8 + $0x290] sm:$0xf]
    %v369 = vld [vmem:[#allocation8 + $0x294] sm:$0xff]
    %v370 = vld [vmem:[#allocation8 + $0x29c] sm:$0xf]
    %v371 = vld [vmem:[#allocation8 + $0x2a0] sm:$0xff]
    %v372 = vld [vmem:[#allocation8 + $0x2a8] sm:$0xf]
    %v373 = vld [vmem:[#allocation8 + $0x2ac] sm:$0xff]
    %v374 = vld [vmem:[#allocation8 + $0x2b4] sm:$0xf]
    %v375 = vld [vmem:[#allocation8 + $0x2b8] sm:$0xff]
    %v376 = vld [vmem:[#allocation8 + $0x2c0] sm:$0xf]
    %v377 = vld [vmem:[#allocation8 + $0x2c4] sm:$0xff]
    %v378 = vld [vmem:[#allocation8 + $0x2cc] sm:$0xf]
    %v379 = vld [vmem:[#allocation8 + $0x2d0] sm:$0xff]
    %v380 = vld [vmem:[#allocation8 + $0x2d8] sm:$0xf]
    %v381 = vld [vmem:[#allocation8 + $0x2dc] sm:$0xff]
    %v382 = vld [vmem:[#allocation8 + $0x2e4] sm:$0xf]
    %v383 = vld [vmem:[#allocation8 + $0x2e8] sm:$0xff]
    %v384 = vld [vmem:[#allocation8 + $0x2f0] sm:$0xf]
    %v385 = vld [vmem:[#allocation8 + $0x2f4] sm:$0xff]
    %v386 = vld [vmem:[#allocation8 + $0x2fc] sm:$0xf]
    %v387 = vld [vmem:[%s4] sm:$0x7]
    %v389 = vlaneseq
    %v390 = vshrl.u32 %v389, 7
    %v391 = vsub.s32 0, %v390
    %v392 = vrot.slane %v387, %v391
    %v393 = vlaneseq
    %v394 = vshrl.u32 %v393, 7
    %v395 = vsub.s32 1, %v394
    %v396 = vrot.slane %v387, %v395
    %v397 = vlaneseq
    %v398 = vshrl.u32 %v397, 7
    %v399 = vsub.s32 2, %v398
    %v400 = vrot.slane %v387, %v399
    %v532 = vunpack.c.l.b16 %v259
    %v533 = vunpack.c.h.b16 %v259
    %v534 = vunpack.c.l.b16 %v260
    %v535 = vunpack.c.l.b16 %v261
    %v536 = vunpack.c.h.b16 %v261
    %v537 = vunpack.c.l.b16 %v262
    %v538 = vunpack.c.l.b16 %v263
    %v539 = vunpack.c.h.b16 %v263
    %v540 = vunpack.c.l.b16 %v264
    %v541 = vunpack.c.l.b16 %v265
    %v542 = vunpack.c.h.b16 %v265
    %v543 = vunpack.c.l.b16 %v266
    %v544 = vunpack.c.l.b16 %v267
    %v545 = vunpack.c.h.b16 %v267
    %v546 = vunpack.c.l.b16 %v268
    %v547 = vunpack.c.l.b16 %v269
    %v548 = vunpack.c.h.b16 %v269
    %v549 = vunpack.c.l.b16 %v270
    %v550 = vunpack.c.l.b16 %v271
    %v551 = vunpack.c.h.b16 %v271
    %v552 = vunpack.c.l.b16 %v272
    %v553 = vunpack.c.l.b16 %v273
    %v554 = vunpack.c.h.b16 %v273
    %v555 = vunpack.c.l.b16 %v274
    %v556 = vunpack.c.l.b16 %v275
    %v557 = vunpack.c.h.b16 %v275
    %v558 = vunpack.c.l.b16 %v276
    %v559 = vunpack.c.l.b16 %v277
    %v560 = vunpack.c.h.b16 %v277
    %v561 = vunpack.c.l.b16 %v278
    %v562 = vunpack.c.l.b16 %v279
    %v563 = vunpack.c.h.b16 %v279
    %v564 = vunpack.c.l.b16 %v280
    %v565 = vunpack.c.l.b16 %v281
    %v566 = vunpack.c.h.b16 %v281
    %v567 = vunpack.c.l.b16 %v282
    %v568 = vunpack.c.l.b16 %v283
    %v569 = vunpack.c.h.b16 %v283
    %v570 = vunpack.c.l.b16 %v284
    %v571 = vunpack.c.l.b16 %v285
    %v572 = vunpack.c.h.b16 %v285
    %v573 = vunpack.c.l.b16 %v286
    %v574 = vunpack.c.l.b16 %v287
    %v575 = vunpack.c.h.b16 %v287
    %v576 = vunpack.c.l.b16 %v288
    %v577 = vunpack.c.l.b16 %v289
    %v578 = vunpack.c.h.b16 %v289
    %v579 = vunpack.c.l.b16 %v290
    %v580 = vunpack.c.l.b16 %v291
    %v581 = vunpack.c.h.b16 %v291
    %v582 = vunpack.c.l.b16 %v292
    %v583 = vunpack.c.l.b16 %v293
    %v584 = vunpack.c.h.b16 %v293
    %v585 = vunpack.c.l.b16 %v294
    %v586 = vunpack.c.l.b16 %v295
    %v587 = vunpack.c.h.b16 %v295
    %v588 = vunpack.c.l.b16 %v296
    %v589 = vunpack.c.l.b16 %v297
    %v590 = vunpack.c.h.b16 %v297
    %v591 = vunpack.c.l.b16 %v298
    %v592 = vunpack.c.l.b16 %v299
    %v593 = vunpack.c.h.b16 %v299
    %v594 = vunpack.c.l.b16 %v300
    %v595 = vunpack.c.l.b16 %v301
    %v596 = vunpack.c.h.b16 %v301
    %v597 = vunpack.c.l.b16 %v302
    %v598 = vunpack.c.l.b16 %v303
    %v599 = vunpack.c.h.b16 %v303
    %v600 = vunpack.c.l.b16 %v304
    %v601 = vunpack.c.l.b16 %v305
    %v602 = vunpack.c.h.b16 %v305
    %v603 = vunpack.c.l.b16 %v306
    %v604 = vunpack.c.l.b16 %v307
    %v605 = vunpack.c.h.b16 %v307
    %v606 = vunpack.c.l.b16 %v308
    %v607 = vunpack.c.l.b16 %v309
    %v608 = vunpack.c.h.b16 %v309
    %v609 = vunpack.c.l.b16 %v310
    %v610 = vunpack.c.l.b16 %v311
    %v611 = vunpack.c.h.b16 %v311
    %v612 = vunpack.c.l.b16 %v312
    %v613 = vunpack.c.l.b16 %v313
    %v614 = vunpack.c.h.b16 %v313
    %v615 = vunpack.c.l.b16 %v314
    %v616 = vunpack.c.l.b16 %v315
    %v617 = vunpack.c.h.b16 %v315
    %v618 = vunpack.c.l.b16 %v316
    %v619 = vunpack.c.l.b16 %v317
    %v620 = vunpack.c.h.b16 %v317
    %v621 = vunpack.c.l.b16 %v318
    %v622 = vunpack.c.l.b16 %v319
    %v623 = vunpack.c.h.b16 %v319
    %v624 = vunpack.c.l.b16 %v320
    %v625 = vunpack.c.l.b16 %v321
    %v626 = vunpack.c.h.b16 %v321
    %v627 = vunpack.c.l.b16 %v322
    %v628 = vunpack.c.l.b16 %v323
    %v629 = vunpack.c.h.b16 %v323
    %v630 = vunpack.c.l.b16 %v324
    %v631 = vunpack.c.l.b16 %v325
    %v632 = vunpack.c.h.b16 %v325
    %v633 = vunpack.c.l.b16 %v326
    %v634 = vunpack.c.l.b16 %v327
    %v635 = vunpack.c.h.b16 %v327
    %v636 = vunpack.c.l.b16 %v328
    %v637 = vunpack.c.l.b16 %v329
    %v638 = vunpack.c.h.b16 %v329
    %v639 = vunpack.c.l.b16 %v330
    %v640 = vunpack.c.l.b16 %v331
    %v641 = vunpack.c.h.b16 %v331
    %v642 = vunpack.c.l.b16 %v332
    %v643 = vunpack.c.l.b16 %v333
    %v644 = vunpack.c.h.b16 %v333
    %v645 = vunpack.c.l.b16 %v334
    %v646 = vunpack.c.l.b16 %v335
    %v647 = vunpack.c.h.b16 %v335
    %v648 = vunpack.c.l.b16 %v336
    %v649 = vunpack.c.l.b16 %v337
    %v650 = vunpack.c.h.b16 %v337
    %v651 = vunpack.c.l.b16 %v338
    %v652 = vunpack.c.l.b16 %v339
    %v653 = vunpack.c.h.b16 %v339
    %v654 = vunpack.c.l.b16 %v340
    %v655 = vunpack.c.l.b16 %v341
    %v656 = vunpack.c.h.b16 %v341
    %v657 = vunpack.c.l.b16 %v342
    %v658 = vunpack.c.l.b16 %v343
    %v659 = vunpack.c.h.b16 %v343
    %v660 = vunpack.c.l.b16 %v344
    %v661 = vunpack.c.l.b16 %v345
    %v662 = vunpack.c.h.b16 %v345
    %v663 = vunpack.c.l.b16 %v346
    %v664 = vunpack.c.l.b16 %v347
    %v665 = vunpack.c.h.b16 %v347
    %v666 = vunpack.c.l.b16 %v348
    %v667 = vunpack.c.l.b16 %v349
    %v668 = vunpack.c.h.b16 %v349
    %v669 = vunpack.c.l.b16 %v350
    %v670 = vunpack.c.l.b16 %v351
    %v671 = vunpack.c.h.b16 %v351
    %v672 = vunpack.c.l.b16 %v352
    %v673 = vunpack.c.l.b16 %v353
    %v674 = vunpack.c.h.b16 %v353
    %v675 = vunpack.c.l.b16 %v354
    %v676 = vunpack.c.l.b16 %v355
    %v677 = vunpack.c.h.b16 %v355
    %v678 = vunpack.c.l.b16 %v356
    %v679 = vunpack.c.l.b16 %v357
    %v680 = vunpack.c.h.b16 %v357
    %v681 = vunpack.c.l.b16 %v358
    %v682 = vunpack.c.l.b16 %v359
    %v683 = vunpack.c.h.b16 %v359
    %v684 = vunpack.c.l.b16 %v360
    %v685 = vunpack.c.l.b16 %v361
    %v686 = vunpack.c.h.b16 %v361
    %v687 = vunpack.c.l.b16 %v362
    %v688 = vunpack.c.l.b16 %v363
    %v689 = vunpack.c.h.b16 %v363
    %v690 = vunpack.c.l.b16 %v364
    %v691 = vunpack.c.l.b16 %v365
    %v692 = vunpack.c.h.b16 %v365
    %v693 = vunpack.c.l.b16 %v366
    %v694 = vunpack.c.l.b16 %v367
    %v695 = vunpack.c.h.b16 %v367
    %v696 = vunpack.c.l.b16 %v368
    %v697 = vunpack.c.l.b16 %v369
    %v698 = vunpack.c.h.b16 %v369
    %v699 = vunpack.c.l.b16 %v370
    %v700 = vunpack.c.l.b16 %v371
    %v701 = vunpack.c.h.b16 %v371
    %v702 = vunpack.c.l.b16 %v372
    %v703 = vunpack.c.l.b16 %v373
    %v704 = vunpack.c.h.b16 %v373
    %v705 = vunpack.c.l.b16 %v374
    %v706 = vunpack.c.l.b16 %v375
    %v707 = vunpack.c.h.b16 %v375
    %v708 = vunpack.c.l.b16 %v376
    %v709 = vunpack.c.l.b16 %v377
    %v710 = vunpack.c.h.b16 %v377
    %v711 = vunpack.c.l.b16 %v378
    %v712 = vunpack.c.l.b16 %v379
    %v713 = vunpack.c.h.b16 %v379
    %v714 = vunpack.c.l.b16 %v380
    %v715 = vunpack.c.l.b16 %v381
    %v716 = vunpack.c.h.b16 %v381
    %v717 = vunpack.c.l.b16 %v382
    %v718 = vunpack.c.l.b16 %v383
    %v719 = vunpack.c.h.b16 %v383
    %v720 = vunpack.c.l.b16 %v384
    %v721 = vunpack.c.l.b16 %v385
    %v722 = vunpack.c.h.b16 %v385
    %v723 = vunpack.c.l.b16 %v386
    %v724 = vpack.c.b16 %v535, %v532
    %v725 = vpack.c.b16 %v536, %v533
    %v726 = vpack.c.b16 %v537, %v534
    %v727 = vpack.c.b16 %v541, %v538
    %v728 = vpack.c.b16 %v542, %v539
    %v729 = vpack.c.b16 %v543, %v540
    %v730 = vpack.c.b16 %v547, %v544
    %v731 = vpack.c.b16 %v548, %v545
    %v732 = vpack.c.b16 %v549, %v546
    %v733 = vpack.c.b16 %v553, %v550
    %v734 = vpack.c.b16 %v554, %v551
    %v735 = vpack.c.b16 %v555, %v552
    %v736 = vpack.c.b16 %v559, %v556
    %v737 = vpack.c.b16 %v560, %v557
    %v738 = vpack.c.b16 %v561, %v558
    %v739 = vpack.c.b16 %v565, %v562
    %v740 = vpack.c.b16 %v566, %v563
    %v741 = vpack.c.b16 %v567, %v564
    %v742 = vpack.c.b16 %v571, %v568
    %v743 = vpack.c.b16 %v572, %v569
    %v744 = vpack.c.b16 %v573, %v570
    %v745 = vpack.c.b16 %v577, %v574
    %v746 = vpack.c.b16 %v578, %v575
    %v747 = vpack.c.b16 %v579, %v576
    %v748 = vpack.c.b16 %v583, %v580
    %v749 = vpack.c.b16 %v584, %v581
    %v750 = vpack.c.b16 %v585, %v582
    %v751 = vpack.c.b16 %v589, %v586
    %v752 = vpack.c.b16 %v590, %v587
    %v753 = vpack.c.b16 %v591, %v588
    %v754 = vpack.c.b16 %v595, %v592
    %v755 = vpack.c.b16 %v596, %v593
    %v756 = vpack.c.b16 %v597, %v594
    %v757 = vpack.c.b16 %v601, %v598
    %v758 = vpack.c.b16 %v602, %v599
    %v759 = vpack.c.b16 %v603, %v600
    %v760 = vpack.c.b16 %v607, %v604
    %v761 = vpack.c.b16 %v608, %v605
    %v762 = vpack.c.b16 %v609, %v606
    %v763 = vpack.c.b16 %v613, %v610
    %v764 = vpack.c.b16 %v614, %v611
    %v765 = vpack.c.b16 %v615, %v612
    %v766 = vpack.c.b16 %v619, %v616
    %v767 = vpack.c.b16 %v620, %v617
    %v768 = vpack.c.b16 %v621, %v618
    %v769 = vpack.c.b16 %v625, %v622
    %v770 = vpack.c.b16 %v626, %v623
    %v771 = vpack.c.b16 %v627, %v624
    %v772 = vpack.c.b16 %v631, %v628
    %v773 = vpack.c.b16 %v632, %v629
    %v774 = vpack.c.b16 %v633, %v630
    %v775 = vpack.c.b16 %v637, %v634
    %v776 = vpack.c.b16 %v638, %v635
    %v777 = vpack.c.b16 %v639, %v636
    %v778 = vpack.c.b16 %v643, %v640
    %v779 = vpack.c.b16 %v644, %v641
    %v780 = vpack.c.b16 %v645, %v642
    %v781 = vpack.c.b16 %v649, %v646
    %v782 = vpack.c.b16 %v650, %v647
    %v783 = vpack.c.b16 %v651, %v648
    %v784 = vpack.c.b16 %v655, %v652
    %v785 = vpack.c.b16 %v656, %v653
    %v786 = vpack.c.b16 %v657, %v654
    %v787 = vpack.c.b16 %v661, %v658
    %v788 = vpack.c.b16 %v662, %v659
    %v789 = vpack.c.b16 %v663, %v660
    %v790 = vpack.c.b16 %v667, %v664
    %v791 = vpack.c.b16 %v668, %v665
    %v792 = vpack.c.b16 %v669, %v666
    %v793 = vpack.c.b16 %v673, %v670
    %v794 = vpack.c.b16 %v674, %v671
    %v795 = vpack.c.b16 %v675, %v672
    %v796 = vpack.c.b16 %v679, %v676
    %v797 = vpack.c.b16 %v680, %v677
    %v798 = vpack.c.b16 %v681, %v678
    %v799 = vpack.c.b16 %v685, %v682
    %v800 = vpack.c.b16 %v686, %v683
    %v801 = vpack.c.b16 %v687, %v684
    %v802 = vpack.c.b16 %v691, %v688
    %v803 = vpack.c.b16 %v692, %v689
    %v804 = vpack.c.b16 %v693, %v690
    %v805 = vpack.c.b16 %v697, %v694
    %v806 = vpack.c.b16 %v698, %v695
    %v807 = vpack.c.b16 %v699, %v696
    %v808 = vpack.c.b16 %v703, %v700
    %v809 = vpack.c.b16 %v704, %v701
    %v810 = vpack.c.b16 %v705, %v702
    %v811 = vpack.c.b16 %v709, %v706
    %v812 = vpack.c.b16 %v710, %v707
    %v813 = vpack.c.b16 %v711, %v708
    %v814 = vpack.c.b16 %v715, %v712
    %v815 = vpack.c.b16 %v716, %v713
    %v816 = vpack.c.b16 %v717, %v714
    %v817 = vpack.c.b16 %v721, %v718
    %v818 = vpack.c.b16 %v722, %v719
    %v819 = vpack.c.b16 %v723, %v720
    %916 = vmatprep.subr.bf16.mxu0 %v746
    %917 = vmatpush1.bf16.msra.mxu0 %v745
    %918 = vmatprep.subr.bf16.mxu0 %v743
    %919 = vmatpush1.bf16.msra.mxu0 %v742
    %920 = vmatprep.subr.bf16.mxu0 %v740
    %921 = vmatpush1.bf16.msra.mxu0 %v739
    %922 = vmatprep.subr.bf16.mxu0 %v737
    %923 = vmatpush1.bf16.msra.mxu0 %v736
    %924 = vmatprep.subr.bf16.mxu0 %v734
    %925 = vmatpush1.bf16.msra.mxu0 %v733
    %926 = vmatprep.subr.bf16.mxu0 %v731
    %927 = vmatpush1.bf16.msra.mxu0 %v730
    %928 = vmatprep.subr.bf16.mxu0 %v728
    %929 = vmatpush1.bf16.msra.mxu0 %v727
    %930 = vmatprep.subr.bf16.mxu0 %v725
    %931 = vmatpush1.bf16.msra.mxu0 %v724
    %932 = vmatprep.subr.bf16.mxu0 %v770
    %933 = vmatpush2.bf16.msra.mxu0 %v769
    %934 = vmatprep.subr.bf16.mxu0 %v767
    %935 = vmatpush2.bf16.msra.mxu0 %v766
    %936 = vmatprep.subr.bf16.mxu0 %v764
    %937 = vmatpush2.bf16.msra.mxu0 %v763
    %938 = vmatprep.subr.bf16.mxu0 %v761
    %939 = vmatpush2.bf16.msra.mxu0 %v760
    %940 = vmatprep.subr.bf16.mxu0 %v758
    %941 = vmatpush2.bf16.msra.mxu0 %v757
    %942 = vmatprep.subr.bf16.mxu0 %v755
    %943 = vmatpush2.bf16.msra.mxu0 %v754
    %944 = vmatprep.subr.bf16.mxu0 %v752
    %945 = vmatpush2.bf16.msra.mxu0 %v751
    %946 = vmatprep.subr.bf16.mxu0 %v749
    %947 = vmatpush2.bf16.msra.mxu0 %v748
    %948 = vmatprep.mubr.bf16.mxu0 %v256
    %949 = vmatmul.mubr.bf16.gmra.mxu0 %v255
    %v950 = vpop.f32.mrf.mxu0
    %v951 = vadd.f32 %v392, %v950
    %v952 = vpop.f32.mrf.mxu0
    %v953 = vadd.f32 %v396, %v952
    %v954 = vpop.f32.mrf.mxu0
    %v955 = vpop.f32.mrf.mxu0
    %956 = vdwg.mxu0
    %957 = vmatprep.subr.bf16.mxu0 %v794
    %958 = vmatpush1.bf16.msra.mxu0 %v793
    %959 = vmatprep.subr.bf16.mxu0 %v791
    %960 = vmatpush1.bf16.msra.mxu0 %v790
    %961 = vmatprep.subr.bf16.mxu0 %v788
    %962 = vmatpush1.bf16.msra.mxu0 %v787
    %963 = vmatprep.subr.bf16.mxu0 %v785
    %964 = vmatpush1.bf16.msra.mxu0 %v784
    %965 = vmatprep.subr.bf16.mxu0 %v782
    %966 = vmatpush1.bf16.msra.mxu0 %v781
    %967 = vmatprep.subr.bf16.mxu0 %v779
    %968 = vmatpush1.bf16.msra.mxu0 %v778
    %969 = vmatprep.subr.bf16.mxu0 %v776
    %970 = vmatpush1.bf16.msra.mxu0 %v775
    %971 = vmatprep.subr.bf16.mxu0 %v773
    %972 = vmatpush1.bf16.msra.mxu0 %v772
    %973 = vmatprep.subr.bf16.mxu0 %v818
    %974 = vmatpush2.bf16.msra.mxu0 %v817
    %975 = vmatprep.subr.bf16.mxu0 %v815
    %976 = vmatpush2.bf16.msra.mxu0 %v814
    %977 = vmatprep.subr.bf16.mxu0 %v812
    %978 = vmatpush2.bf16.msra.mxu0 %v811
    %979 = vmatprep.subr.bf16.mxu0 %v809
    %980 = vmatpush2.bf16.msra.mxu0 %v808
    %981 = vmatprep.subr.bf16.mxu0 %v806
    %982 = vmatpush2.bf16.msra.mxu0 %v805
    %983 = vmatprep.subr.bf16.mxu0 %v803
    %984 = vmatpush2.bf16.msra.mxu0 %v802
    %985 = vmatprep.subr.bf16.mxu0 %v800
    %986 = vmatpush2.bf16.msra.mxu0 %v799
    %987 = vmatprep.subr.bf16.mxu0 %v797
    %988 = vmatpush2.bf16.msra.mxu0 %v796
    %989 = vmatprep.mubr.bf16.mxu0 %v258
    %990 = vmatmul.mubr.bf16.gmra.mxu0 %v257
    %v991 = vpop.f32.mrf.mxu0
    %v992 = vadd.f32 %v951, %v991
    %v993 = vpop.f32.mrf.mxu0
    %v994 = vadd.f32 %v953, %v993
    %v995 = vpop.f32.mrf.mxu0
    %v996 = vpop.f32.mrf.mxu0
    %997 = vdwg.mxu0
    %998 = vmatprep.subr.bf16.mxu0 0
    %999 = vmatpush1.bf16.msra.mxu0 %v747
    %1000 = vmatprep.subr.bf16.mxu0 0
    %1001 = vmatpush1.bf16.msra.mxu0 %v744
    %1002 = vmatprep.subr.bf16.mxu0 0
    %1003 = vmatpush1.bf16.msra.mxu0 %v741
    %1004 = vmatprep.subr.bf16.mxu0 0
    %1005 = vmatpush1.bf16.msra.mxu0 %v738
    %1006 = vmatprep.subr.bf16.mxu0 0
    %1007 = vmatpush1.bf16.msra.mxu0 %v735
    %1008 = vmatprep.subr.bf16.mxu0 0
    %1009 = vmatpush1.bf16.msra.mxu0 %v732
    %1010 = vmatprep.subr.bf16.mxu0 0
    %1011 = vmatpush1.bf16.msra.mxu0 %v729
    %1012 = vmatprep.subr.bf16.mxu0 0
    %1013 = vmatpush1.bf16.msra.mxu0 %v726
    %1014 = vmatprep.subr.bf16.mxu0 0
    %1015 = vmatpush2.bf16.msra.mxu0 %v771
    %1016 = vmatprep.subr.bf16.mxu0 0
    %1017 = vmatpush2.bf16.msra.mxu0 %v768
    %1018 = vmatprep.subr.bf16.mxu0 0
    %1019 = vmatpush2.bf16.msra.mxu0 %v765
    %1020 = vmatprep.subr.bf16.mxu0 0
    %1021 = vmatpush2.bf16.msra.mxu0 %v762
    %1022 = vmatprep.subr.bf16.mxu0 0
    %1023 = vmatpush2.bf16.msra.mxu0 %v759
    %1024 = vmatprep.subr.bf16.mxu0 0
    %1025 = vmatpush2.bf16.msra.mxu0 %v756
    %1026 = vmatprep.subr.bf16.mxu0 0
    %1027 = vmatpush2.bf16.msra.mxu0 %v753
    %1028 = vmatprep.subr.bf16.mxu0 0
    %1029 = vmatpush2.bf16.msra.mxu0 %v750
    %1030 = vmatprep.mubr.bf16.mxu0 %v256
    %1031 = vmatmul.mubr.bf16.gmra.mxu0 %v255
    %v1032 = vpop.f32.mrf.mxu0
    %v1033 = vadd.f32 %v400, %v1032
    %v1034 = vpop.f32.mrf.mxu0
    %v1035 = vpop.f32.mrf.mxu0
    %v1036 = vpop.f32.mrf.mxu0
    %1037 = vdwg.mxu0
    %1038 = vmatprep.subr.bf16.mxu0 0
    %1039 = vmatpush1.bf16.msra.mxu0 %v795
    %1040 = vmatprep.subr.bf16.mxu0 0
    %1041 = vmatpush1.bf16.msra.mxu0 %v792
    %1042 = vmatprep.subr.bf16.mxu0 0
    %1043 = vmatpush1.bf16.msra.mxu0 %v789
    %1044 = vmatprep.subr.bf16.mxu0 0
    %1045 = vmatpush1.bf16.msra.mxu0 %v786
    %1046 = vmatprep.subr.bf16.mxu0 0
    %1047 = vmatpush1.bf16.msra.mxu0 %v783
    %1048 = vmatprep.subr.bf16.mxu0 0
    %1049 = vmatpush1.bf16.msra.mxu0 %v780
    %1050 = vmatprep.subr.bf16.mxu0 0
    %1051 = vmatpush1.bf16.msra.mxu0 %v777
    %1052 = vmatprep.subr.bf16.mxu0 0
    %1053 = vmatpush1.bf16.msra.mxu0 %v774
    %1054 = vmatprep.subr.bf16.mxu0 0
    %1055 = vmatpush2.bf16.msra.mxu0 %v819
    %1056 = vmatprep.subr.bf16.mxu0 0
    %1057 = vmatpush2.bf16.msra.mxu0 %v816
    %1058 = vmatprep.subr.bf16.mxu0 0
    %1059 = vmatpush2.bf16.msra.mxu0 %v813
    %1060 = vmatprep.subr.bf16.mxu0 0
    %1061 = vmatpush2.bf16.msra.mxu0 %v810
    %1062 = vmatprep.subr.bf16.mxu0 0
    %1063 = vmatpush2.bf16.msra.mxu0 %v807
    %1064 = vmatprep.subr.bf16.mxu0 0
    %1065 = vmatpush2.bf16.msra.mxu0 %v804
    %1066 = vmatprep.subr.bf16.mxu0 0
    %1067 = vmatpush2.bf16.msra.mxu0 %v801
    %1068 = vmatprep.subr.bf16.mxu0 0
    %1069 = vmatpush2.bf16.msra.mxu0 %v798
    %1070 = vmatprep.mubr.bf16.mxu0 %v258
    %1071 = vmatmul.mubr.bf16.gmra.mxu0 %v257
    %v1072 = vpop.f32.mrf.mxu0
    %v1073 = vadd.f32 %v1033, %v1072
    %v1074 = vpop.f32.mrf.mxu0
    %v1075 = vpop.f32.mrf.mxu0
    %v1076 = vpop.f32.mrf.mxu0
    %1077 = vdwg.mxu0
    %v1078 = vmax.f32 %v992, 0.0
    %v1079 = vmax.f32 %v994, 0.0
    %v1080 = vmax.f32 %v1073, 0.0
    %v1081 = vpack.c.bf16 %v1078, %v1078
    %v1082 = vpack.c.bf16 %v1079, %v1079
    %v1083 = vpack.c.bf16 %v1080, %v1080
    %v1084 = vld [vmem:[#allocation10] sm:$0xf]
    %v1085 = vld [vmem:[#allocation10 + $0x4] sm:$0xf]
    %v1086 = vld [vmem:[#allocation10 + $0x8] sm:$0xf]
    %v1087 = vld [vmem:[#allocation10 + $0xc] sm:$0xf]
    %v1088 = vld [vmem:[#allocation10 + $0x10] sm:$0xf]
    %v1089 = vld [vmem:[#allocation10 + $0x14] sm:$0xf]
    %v1090 = vld [vmem:[#allocation10 + $0x18] sm:$0xf]
    %v1091 = vld [vmem:[#allocation10 + $0x1c] sm:$0xf]
    %v1092 = vld [vmem:[#allocation10 + $0x20] sm:$0xf]
    %v1093 = vld [vmem:[#allocation10 + $0x24] sm:$0xf]
    %v1094 = vld [vmem:[#allocation10 + $0x28] sm:$0xf]
    %v1095 = vld [vmem:[#allocation10 + $0x2c] sm:$0xf]
    %v1096 = vld [vmem:[#allocation10 + $0x30] sm:$0xf]
    %v1097 = vld [vmem:[#allocation10 + $0x34] sm:$0xf]
    %v1098 = vld [vmem:[#allocation10 + $0x38] sm:$0xf]
    %v1099 = vld [vmem:[#allocation10 + $0x3c] sm:$0xf]
    %v1100 = vld [vmem:[#allocation10 + $0x40] sm:$0xf]
    %v1101 = vld [vmem:[#allocation10 + $0x44] sm:$0xf]
    %v1102 = vld [vmem:[#allocation10 + $0x48] sm:$0xf]
    %v1103 = vld [vmem:[#allocation10 + $0x4c] sm:$0xf]
    %v1104 = vld [vmem:[#allocation10 + $0x50] sm:$0xf]
    %v1105 = vld [vmem:[#allocation10 + $0x54] sm:$0xf]
    %v1106 = vld [vmem:[#allocation10 + $0x58] sm:$0xf]
    %v1107 = vld [vmem:[#allocation10 + $0x5c] sm:$0xf]
    %v1108 = vld [vmem:[#allocation10 + $0x60] sm:$0xf]
    %v1109 = vld [vmem:[#allocation10 + $0x64] sm:$0xf]
    %v1110 = vld [vmem:[#allocation10 + $0x68] sm:$0xf]
    %v1111 = vld [vmem:[#allocation10 + $0x6c] sm:$0xf]
    %v1112 = vld [vmem:[#allocation10 + $0x70] sm:$0xf]
    %v1113 = vld [vmem:[#allocation10 + $0x74] sm:$0xf]
    %v1114 = vld [vmem:[#allocation10 + $0x78] sm:$0xf]
    %v1115 = vld [vmem:[#allocation10 + $0x7c] sm:$0xf]
    %v1116 = vld [vmem:[#allocation10 + $0x80] sm:$0xf]
    %v1117 = vld [vmem:[#allocation10 + $0x84] sm:$0xf]
    %v1118 = vld [vmem:[#allocation10 + $0x88] sm:$0xf]
    %v1119 = vld [vmem:[#allocation10 + $0x8c] sm:$0xf]
    %v1120 = vld [vmem:[#allocation10 + $0x90] sm:$0xf]
    %v1121 = vld [vmem:[#allocation10 + $0x94] sm:$0xf]
    %v1122 = vld [vmem:[#allocation10 + $0x98] sm:$0xf]
    %v1123 = vld [vmem:[#allocation10 + $0x9c] sm:$0xf]
    %v1124 = vld [vmem:[#allocation10 + $0xa0] sm:$0xf]
    %v1125 = vld [vmem:[#allocation10 + $0xa4] sm:$0xf]
    %v1126 = vld [vmem:[#allocation10 + $0xa8] sm:$0xf]
    %v1127 = vld [vmem:[#allocation10 + $0xac] sm:$0xf]
    %v1128 = vld [vmem:[#allocation10 + $0xb0] sm:$0xf]
    %v1129 = vld [vmem:[#allocation10 + $0xb4] sm:$0xf]
    %v1130 = vld [vmem:[#allocation10 + $0xb8] sm:$0xf]
    %v1131 = vld [vmem:[#allocation10 + $0xbc] sm:$0xf]
    %v1132 = vld [vmem:[%s6] sm:$0x1]
    %v1134 = vlaneseq
    %v1135 = vshrl.u32 %v1134, 7
    %v1136 = vsub.s32 0, %v1135
    %v1137 = vrot.slane %v1132, %v1136
    %v1187 = vunpack.c.l.b16 %v1084
    %v1188 = vunpack.c.l.b16 %v1085
    %v1189 = vunpack.c.l.b16 %v1086
    %v1190 = vunpack.c.l.b16 %v1087
    %v1191 = vunpack.c.l.b16 %v1088
    %v1192 = vunpack.c.l.b16 %v1089
    %v1193 = vunpack.c.l.b16 %v1090
    %v1194 = vunpack.c.l.b16 %v1091
    %v1195 = vunpack.c.l.b16 %v1092
    %v1196 = vunpack.c.l.b16 %v1093
    %v1197 = vunpack.c.l.b16 %v1094
    %v1198 = vunpack.c.l.b16 %v1095
    %v1199 = vunpack.c.l.b16 %v1096
    %v1200 = vunpack.c.l.b16 %v1097
    %v1201 = vunpack.c.l.b16 %v1098
    %v1202 = vunpack.c.l.b16 %v1099
    %v1203 = vunpack.c.l.b16 %v1100
    %v1204 = vunpack.c.l.b16 %v1101
    %v1205 = vunpack.c.l.b16 %v1102
    %v1206 = vunpack.c.l.b16 %v1103
    %v1207 = vunpack.c.l.b16 %v1104
    %v1208 = vunpack.c.l.b16 %v1105
    %v1209 = vunpack.c.l.b16 %v1106
    %v1210 = vunpack.c.l.b16 %v1107
    %v1211 = vunpack.c.l.b16 %v1108
    %v1212 = vunpack.c.l.b16 %v1109
    %v1213 = vunpack.c.l.b16 %v1110
    %v1214 = vunpack.c.l.b16 %v1111
    %v1215 = vunpack.c.l.b16 %v1112
    %v1216 = vunpack.c.l.b16 %v1113
    %v1217 = vunpack.c.l.b16 %v1114
    %v1218 = vunpack.c.l.b16 %v1115
    %v1219 = vunpack.c.l.b16 %v1116
    %v1220 = vunpack.c.l.b16 %v1117
    %v1221 = vunpack.c.l.b16 %v1118
    %v1222 = vunpack.c.l.b16 %v1119
    %v1223 = vunpack.c.l.b16 %v1120
    %v1224 = vunpack.c.l.b16 %v1121
    %v1225 = vunpack.c.l.b16 %v1122
    %v1226 = vunpack.c.l.b16 %v1123
    %v1227 = vunpack.c.l.b16 %v1124
    %v1228 = vunpack.c.l.b16 %v1125
    %v1229 = vunpack.c.l.b16 %v1126
    %v1230 = vunpack.c.l.b16 %v1127
    %v1231 = vunpack.c.l.b16 %v1128
    %v1232 = vunpack.c.l.b16 %v1129
    %v1233 = vunpack.c.l.b16 %v1130
    %v1234 = vunpack.c.l.b16 %v1131
    %v1235 = vpack.c.b16 %v1188, %v1187
    %v1236 = vpack.c.b16 %v1190, %v1189
    %v1237 = vpack.c.b16 %v1192, %v1191
    %v1238 = vpack.c.b16 %v1194, %v1193
    %v1239 = vpack.c.b16 %v1196, %v1195
    %v1240 = vpack.c.b16 %v1198, %v1197
    %v1241 = vpack.c.b16 %v1200, %v1199
    %v1242 = vpack.c.b16 %v1202, %v1201
    %v1243 = vpack.c.b16 %v1204, %v1203
    %v1244 = vpack.c.b16 %v1206, %v1205
    %v1245 = vpack.c.b16 %v1208, %v1207
    %v1246 = vpack.c.b16 %v1210, %v1209
    %v1247 = vpack.c.b16 %v1212, %v1211
    %v1248 = vpack.c.b16 %v1214, %v1213
    %v1249 = vpack.c.b16 %v1216, %v1215
    %v1250 = vpack.c.b16 %v1218, %v1217
    %v1251 = vpack.c.b16 %v1220, %v1219
    %v1252 = vpack.c.b16 %v1222, %v1221
    %v1253 = vpack.c.b16 %v1224, %v1223
    %v1254 = vpack.c.b16 %v1226, %v1225
    %v1255 = vpack.c.b16 %v1228, %v1227
    %v1256 = vpack.c.b16 %v1230, %v1229
    %v1257 = vpack.c.b16 %v1232, %v1231
    %v1258 = vpack.c.b16 %v1234, %v1233
    %1283 = vmatprep.subr.bf16.mxu0 0
    %1284 = vmatpush1.bf16.msra.mxu0 %v1242
    %1285 = vmatprep.subr.bf16.mxu0 0
    %1286 = vmatpush1.bf16.msra.mxu0 %v1241
    %1287 = vmatprep.subr.bf16.mxu0 0
    %1288 = vmatpush1.bf16.msra.mxu0 %v1240
    %1289 = vmatprep.subr.bf16.mxu0 0
    %1290 = vmatpush1.bf16.msra.mxu0 %v1239
    %1291 = vmatprep.subr.bf16.mxu0 0
    %1292 = vmatpush1.bf16.msra.mxu0 %v1238
    %1293 = vmatprep.subr.bf16.mxu0 0
    %1294 = vmatpush1.bf16.msra.mxu0 %v1237
    %1295 = vmatprep.subr.bf16.mxu0 0
    %1296 = vmatpush1.bf16.msra.mxu0 %v1236
    %1297 = vmatprep.subr.bf16.mxu0 0
    %1298 = vmatpush1.bf16.msra.mxu0 %v1235
    %1299 = vmatprep.subr.bf16.mxu0 0
    %1300 = vmatpush2.bf16.msra.mxu0 %v1250
    %1301 = vmatprep.subr.bf16.mxu0 0
    %1302 = vmatpush2.bf16.msra.mxu0 %v1249
    %1303 = vmatprep.subr.bf16.mxu0 0
    %1304 = vmatpush2.bf16.msra.mxu0 %v1248
    %1305 = vmatprep.subr.bf16.mxu0 0
    %1306 = vmatpush2.bf16.msra.mxu0 %v1247
    %1307 = vmatprep.subr.bf16.mxu0 0
    %1308 = vmatpush2.bf16.msra.mxu0 %v1246
    %1309 = vmatprep.subr.bf16.mxu0 0
    %1310 = vmatpush2.bf16.msra.mxu0 %v1245
    %1311 = vmatprep.subr.bf16.mxu0 0
    %1312 = vmatpush2.bf16.msra.mxu0 %v1244
    %1313 = vmatprep.subr.bf16.mxu0 0
    %1314 = vmatpush2.bf16.msra.mxu0 %v1243
    %1315 = vmatprep.mubr.bf16.mxu0 %v1082
    %1316 = vmatmul.mubr.bf16.gmra.mxu0 %v1081
    %v1317 = vpop.f32.mrf.mxu0
    %v1318 = vadd.f32 %v1137, %v1317
    %v1319 = vpop.f32.mrf.mxu0
    %v1320 = vpop.f32.mrf.mxu0
    %v1321 = vpop.f32.mrf.mxu0
    %1322 = vdwg.mxu0
    %1323 = vmatprep.subr.bf16.mxu0 0
    %1324 = vmatpush1.bf16.msra.mxu0 %v1258
    %1325 = vmatprep.subr.bf16.mxu0 0
    %1326 = vmatpush1.bf16.msra.mxu0 %v1257
    %1327 = vmatprep.subr.bf16.mxu0 0
    %1328 = vmatpush1.bf16.msra.mxu0 %v1256
    %1329 = vmatprep.subr.bf16.mxu0 0
    %1330 = vmatpush1.bf16.msra.mxu0 %v1255
    %1331 = vmatprep.subr.bf16.mxu0 0
    %1332 = vmatpush1.bf16.msra.mxu0 %v1254
    %1333 = vmatprep.subr.bf16.mxu0 0
    %1334 = vmatpush1.bf16.msra.mxu0 %v1253
    %1335 = vmatprep.subr.bf16.mxu0 0
    %1336 = vmatpush1.bf16.msra.mxu0 %v1252
    %1337 = vmatprep.subr.bf16.mxu0 0
    %1338 = vmatpush1.bf16.msra.mxu0 %v1251
    %1339 = vmatprep.subr.bf16.mxu0 0
    %1340 = vmatpush2.bf16.msra.mxu0 0
    %1341 = vmatprep.subr.bf16.mxu0 0
    %1342 = vmatpush2.bf16.msra.mxu0 0
    %1343 = vmatprep.subr.bf16.mxu0 0
    %1344 = vmatpush2.bf16.msra.mxu0 0
    %1345 = vmatprep.subr.bf16.mxu0 0
    %1346 = vmatpush2.bf16.msra.mxu0 0
    %1347 = vmatprep.subr.bf16.mxu0 0
    %1348 = vmatpush2.bf16.msra.mxu0 0
    %1349 = vmatprep.subr.bf16.mxu0 0
    %1350 = vmatpush2.bf16.msra.mxu0 0
    %1351 = vmatprep.subr.bf16.mxu0 0
    %1352 = vmatpush2.bf16.msra.mxu0 0
    %1353 = vmatprep.subr.bf16.mxu0 0
    %1354 = vmatpush2.bf16.msra.mxu0 0
    %1355 = vmatprep.mubr.bf16.mxu0 0
    %1356 = vmatmul.mubr.bf16.gmra.mxu0 %v1083
    %v1357 = vpop.f32.mrf.mxu0
    %v1358 = vadd.f32 %v1318, %v1357
    %v1359 = vpop.f32.mrf.mxu0
    %v1360 = vpop.f32.mrf.mxu0
    %v1361 = vpop.f32.mrf.mxu0
    %1362 = vdwg.mxu0
    %v1363 = vtanh.pop %v1358
    %v1364 = vmul.f32 %v1363, 2.0
    %v1365 = vpack.c.bf16 %v1364, %v1364
    %1366 = vst [vmem:[#allocation11] sm:$0xf] %v1365
    // Predicated region
    $region50: #{tpu_custom_call.1} parent=1 // pred_check
      _
    $region51: #{tpu_custom_call.1} parent=1 // pred_check_branch
      %1368 = sbr.rel (0) target = $region53
    $region52: #{tpu_custom_call.1} parent=1 // pred_region
      %s1370 = ssub.s32 64, 64
      %1371 = vsyncadd [#allocation4], %s1370
      %s1373 = sshll.u32 [#allocation11], 4
      %s1374 = int_to_ptr.vmem [resolvable:$true] %s1373
      %1376 = dma.vmem_to_hbm [thread:$0]  %s1374, 64, %s7, [#allocation4]
    $region53: #{tpu_custom_call.1} parent=1 // pred_fallthru
      _
    // Predicated region
    $region54: #{tpu_custom_call.1} parent=1 // pred_check
      _
    $region55: #{tpu_custom_call.1} parent=1 // pred_check_branch
      %1378 = sbr.rel (0) target = $region57
    $region56: #{tpu_custom_call.1} parent=1 // pred_region
      %1379 = dma.done [#allocation4], 64
    $region57: #{tpu_custom_call.1} parent=1 // pred_fallthru
      _
    %1380 = vsyncpa [#allocation3], 1
    %1381 = vsyncpa [#allocation6], 1
    %1382 = vsyncpa [#allocation9], 1
    %1383 = vsyncpa [#allocation4], 1

</llo_original>
